<compile_context>
chip_gen: v5e
topology: v5e:2x2
jax: 0.10.0
libtpu: 0.0.40
codegen_flags: <defaults>
</compile_context>

<pallas_src>
import jax
import jax.numpy as jnp
from jax.experimental import pallas as pl
from jax.experimental.pallas import tpu as pltpu


DIMS = [256, 128, 64, 32, 16, 3]   # layer widths
OUT_PAD = 8                        # padded width of the final layer's output


def _round_up(n, m):
    return ((n + m - 1) // m) * m


def _mlp_kernel(x_ref,
                w1_ref, b1_ref,
                w2_ref, b2_ref,
                w3_ref, b3_ref,
                w4_ref, b4_ref,
                w5_ref, b5_ref,
                o_ref):
    # x tile: [TILE_B, 256] f32 straight from HBM.  Cast in-kernel for the one
    # large matmul (w1 is bf16); everything downstream is f32.
    x = x_ref[...].astype(jnp.bfloat16)

    h = jnp.dot(x, w1_ref[...], preferred_element_type=jnp.float32) + b1_ref[...]
    h = jnp.maximum(h, 0.0)                                          # 256 -> 128

    h = jnp.dot(h, w2_ref[...], preferred_element_type=jnp.float32) + b2_ref[...]
    h = jnp.maximum(h, 0.0)                                          # 128 -> 64

    h = jnp.dot(h, w3_ref[...], preferred_element_type=jnp.float32) + b3_ref[...]
    h = jnp.maximum(h, 0.0)                                          # 64 -> 32

    h = jnp.dot(h, w4_ref[...], preferred_element_type=jnp.float32) + b4_ref[...]
    h = jnp.maximum(h, 0.0)                                          # 32 -> 16

    out = jnp.dot(h, w5_ref[...], preferred_element_type=jnp.float32) + b5_ref[...]
    o_ref[...] = out.astype(o_ref.dtype)                             # 16 -> 8 (cols 3.. zero)


def feature_linear_layer_3_output(x, params, *, tile_b=4096):
    """x: [B, 256] float array.  params: list of 5 (W[in,out] f32, b[out] f32)."""
    B, F = x.shape
    assert F == DIMS[0]
    assert len(params) == len(DIMS) - 1

    # --- pack params: W1 bf16 (MXU-native for the large layer), W2..W5 f32,
    #     biases f32 as [1, out]; last layer zero-padded to OUT_PAD columns.
    flat = []
    for li, (w, b) in enumerate(params):
        fan_in, fan_out = DIMS[li], DIMS[li + 1]
        assert w.shape == (fan_in, fan_out)
        b2d = b.reshape(1, fan_out).astype(jnp.float32)
        w = w.astype(jnp.bfloat16 if li == 0 else jnp.float32)
        if li == len(params) - 1:
            w = jnp.pad(w, ((0, 0), (0, OUT_PAD - fan_out)))
            b2d = jnp.pad(b2d, ((0, 0), (0, OUT_PAD - fan_out)))
        flat.append(w)
        flat.append(b2d)

    # --- batch tiling: no padding of x; ragged last block is clipped by Pallas.
    #     Keep >= 2 grid steps for batches that can use both v7x TensorCores.
    tile_b = int(tile_b)
    if B > 32:
        tile_b = min(tile_b, _round_up(pl.cdiv(B, 2), 16))
    tile_b = _round_up(max(16, min(tile_b, B)), 16)
    grid = (pl.cdiv(B, tile_b),)

    x_spec = pl.BlockSpec((tile_b, DIMS[0]), lambda i: (i, 0))
    out_spec = pl.BlockSpec((tile_b, OUT_PAD), lambda i: (i, 0))
    param_specs = [pl.BlockSpec(p.shape, lambda i: (0, 0)) for p in flat]

    # --- VMEM budget: double-buffered x/out tiles + in-kernel activations +
    #     resident weights (small).  Stay well below v7x's 64 MiB physical VMEM.
    vmem_need = (
        2 * tile_b * DIMS[0] * 4                      # x double-buffer (f32)
        + 2 * tile_b * OUT_PAD * 4                    # out double-buffer (f32)
        + tile_b * (DIMS[0] * 2                       # bf16 copy of x tile
                    + (DIMS[1] + DIMS[2] + DIMS[3] + DIMS[4] + OUT_PAD) * 4)
        + 512 * 1024                                  # weights + slack
    )
    vmem_limit = min(_round_up(int(vmem_need * 1.25), 1 << 20) + (1 << 20),
                     40 * 1024 * 1024)

    flops_per_row = 2 * sum(DIMS[i] * DIMS[i + 1] for i in range(len(DIMS) - 1))
    weight_bytes = sum(int(p.size) * p.dtype.itemsize for p in flat)
    cost = pl.CostEstimate(
        flops=int(B) * flops_per_row,
        transcendentals=0,
        bytes_accessed=int(B) * (DIMS[0] * 4 + OUT_PAD * 4) + weight_bytes,
    )

    out_padded = pl.pallas_call(
        _mlp_kernel,
        out_shape=jax.ShapeDtypeStruct((B, OUT_PAD), jnp.float32),
        grid=grid,
        in_specs=[x_spec] + param_specs,
        out_specs=out_spec,
        compiler_params=pltpu.CompilerParams(
            dimension_semantics=(pltpu.PARALLEL,),
            vmem_limit_bytes=vmem_limit,
        ),
        cost_estimate=cost,
    )(x, *flat)

    return out_padded[:, :DIMS[-1]]


def init_params(key):
    """PyTorch nn.Linear default init: U(-1/sqrt(fan_in), 1/sqrt(fan_in))."""
    params = []
    for i in range(len(DIMS) - 1):
        fan_in, fan_out = DIMS[i], DIMS[i + 1]
        key, kw, kb = jax.random.split(key, 3)
        bound = 1.0 / jnp.sqrt(jnp.float32(fan_in))
        w = jax.random.uniform(kw, (fan_in, fan_out), jnp.float32, -bound, bound)
        b = jax.random.uniform(kb, (fan_out,), jnp.float32, -bound, bound)
        params.append((w, b))
    return params


def reference(x, params):
    """Pure-JAX f32 reference of the eval-mode forward pass (Dropout = identity)."""
    h = x
    for i, (w, b) in enumerate(params):
        h = h @ w + b
        if i < len(params) - 1:
            h = jnp.maximum(h, 0.0)
    return h


if __name__ == "__main__":
    key = jax.random.PRNGKey(0)
    key, kx = jax.random.split(key)

    params = init_params(key)

    # Small-batch case (single ragged grid step).
    B = 8
    x = jax.random.normal(kx, (B, DIMS[0]), jnp.float32)
    out = jax.block_until_ready(feature_linear_layer_3_output(x, params))
    ref = reference(x, params)
    assert out.shape == (B, DIMS[-1]), out.shape
    # Only the 256x128 layer uses bf16 inputs (f32 accumulation) -> tight tol.
    assert jnp.allclose(out, ref, atol=2e-2, rtol=2e-2), \
        f"max abs err {jnp.max(jnp.abs(out - ref))}"

    # Exercise the multi-step grid + ragged-last-block path
    # (200 rows, 64-row tiles -> grid=(4,), last block masked).
    key, kx2 = jax.random.split(key)
    B2 = 200
    x2 = jax.random.normal(kx2, (B2, DIMS[0]), jnp.float32)
    out2 = jax.block_until_ready(
        feature_linear_layer_3_output(x2, params, tile_b=64))
    ref2 = reference(x2, params)
    assert out2.shape == (B2, DIMS[-1]), out2.shape
    assert jnp.allclose(out2, ref2, atol=2e-2, rtol=2e-2), \
        f"max abs err {jnp.max(jnp.abs(out2 - ref2))}"

    print("KERNEL_OK")
</pallas_src>

<mosaic_0001>
module attributes {stable_mosaic.version = 11 : i64} {
  func.func @_mlp_kernel(%arg0: i32, %arg1: memref<16x256xf32, #tpu.memory_space<vmem>>, %arg2: memref<256x128xbf16, #tpu.memory_space<vmem>>, %arg3: memref<1x128xf32, #tpu.memory_space<vmem>>, %arg4: memref<128x64xf32, #tpu.memory_space<vmem>>, %arg5: memref<1x64xf32, #tpu.memory_space<vmem>>, %arg6: memref<64x32xf32, #tpu.memory_space<vmem>>, %arg7: memref<1x32xf32, #tpu.memory_space<vmem>>, %arg8: memref<32x16xf32, #tpu.memory_space<vmem>>, %arg9: memref<1x16xf32, #tpu.memory_space<vmem>>, %arg10: memref<16x8xf32, #tpu.memory_space<vmem>>, %arg11: memref<1x8xf32, #tpu.memory_space<vmem>>, %arg12: memref<16x8xf32, #tpu.memory_space<vmem>>) attributes {dimension_semantics = [#tpu.dimension_semantics<parallel>], iteration_bounds = array<i64: 1>, scalar_prefetch = 0 : i64, scratch_operands = 0 : i64, tpu.core_type = #tpu.core_type<tc>, window_params = [{transform_indices = @transform_0, window_bounds = array<i64: 16, 256>}, {pipeline_mode = #tpu.pipeline_mode<synchronous>, transform_indices = @transform_1, window_bounds = array<i64: 256, 128>}, {pipeline_mode = #tpu.pipeline_mode<synchronous>, transform_indices = @transform_2, window_bounds = array<i64: 1, 128>}, {pipeline_mode = #tpu.pipeline_mode<synchronous>, transform_indices = @transform_3, window_bounds = array<i64: 128, 64>}, {pipeline_mode = #tpu.pipeline_mode<synchronous>, transform_indices = @transform_4, window_bounds = array<i64: 1, 64>}, {pipeline_mode = #tpu.pipeline_mode<synchronous>, transform_indices = @transform_5, window_bounds = array<i64: 64, 32>}, {pipeline_mode = #tpu.pipeline_mode<synchronous>, transform_indices = @transform_6, window_bounds = array<i64: 1, 32>}, {pipeline_mode = #tpu.pipeline_mode<synchronous>, transform_indices = @transform_7, window_bounds = array<i64: 32, 16>}, {pipeline_mode = #tpu.pipeline_mode<synchronous>, transform_indices = @transform_8, window_bounds = array<i64: 1, 16>}, {pipeline_mode = #tpu.pipeline_mode<synchronous>, transform_indices = @transform_9, window_bounds = array<i64: 16, 8>}, {pipeline_mode = #tpu.pipeline_mode<synchronous>, transform_indices = @transform_10, window_bounds = array<i64: 1, 8>}, {transform_indices = @transform_11, window_bounds = array<i64: 16, 8>}]} {
    %c0 = arith.constant 0 : index
    %c0_0 = arith.constant 0 : index
    %0 = vector.load %arg1[%c0, %c0_0] : memref<16x256xf32, #tpu.memory_space<vmem>>, vector<16x256xf32>
    %1 = arith.truncf %0 : vector<16x256xf32> to vector<16x256xbf16>
    %c0_1 = arith.constant 0 : index
    %c0_2 = arith.constant 0 : index
    %2 = vector.load %arg2[%c0_1, %c0_2] : memref<256x128xbf16, #tpu.memory_space<vmem>>, vector<256x128xbf16>
    %cst = arith.constant dense<0.000000e+00> : vector<16x128xf32>
    %3 = tpu.matmul %1, %2, %cst {dimension_numbers = #tpu.dot_dimension_numbers<[1], [0], [0], [1], [0, 0, 1, 1], [], []>} : vector<16x256xbf16>, vector<256x128xbf16>, vector<16x128xf32> -> vector<16x128xf32>
    %c0_3 = arith.constant 0 : index
    %c0_4 = arith.constant 0 : index
    %4 = vector.load %arg3[%c0_3, %c0_4] : memref<1x128xf32, #tpu.memory_space<vmem>>, vector<1x128xf32>
    %5 = vector.broadcast %4 : vector<1x128xf32> to vector<16x128xf32>
    %6 = arith.addf %3, %5 : vector<16x128xf32>
    %cst_5 = arith.constant 0.000000e+00 : f32
    %7 = vector.broadcast %cst_5 : f32 to vector<16x128xf32>
    %8 = arith.maximumf %6, %7 : vector<16x128xf32>
    %c0_6 = arith.constant 0 : index
    %c0_7 = arith.constant 0 : index
    %9 = vector.load %arg4[%c0_6, %c0_7] : memref<128x64xf32, #tpu.memory_space<vmem>>, vector<128x64xf32>
    %cst_8 = arith.constant dense<0.000000e+00> : vector<16x64xf32>
    %10 = tpu.matmul %8, %9, %cst_8 {dimension_numbers = #tpu.dot_dimension_numbers<[1], [0], [0], [1], [0, 0, 1, 1], [], []>} : vector<16x128xf32>, vector<128x64xf32>, vector<16x64xf32> -> vector<16x64xf32>
    %c0_9 = arith.constant 0 : index
    %c0_10 = arith.constant 0 : index
    %11 = vector.load %arg5[%c0_9, %c0_10] : memref<1x64xf32, #tpu.memory_space<vmem>>, vector<1x64xf32>
    %12 = vector.broadcast %11 : vector<1x64xf32> to vector<16x64xf32>
    %13 = arith.addf %10, %12 : vector<16x64xf32>
    %cst_11 = arith.constant 0.000000e+00 : f32
    %14 = vector.broadcast %cst_11 : f32 to vector<16x64xf32>
    %15 = arith.maximumf %13, %14 : vector<16x64xf32>
    %c0_12 = arith.constant 0 : index
    %c0_13 = arith.constant 0 : index
    %16 = vector.load %arg6[%c0_12, %c0_13] : memref<64x32xf32, #tpu.memory_space<vmem>>, vector<64x32xf32>
    %cst_14 = arith.constant dense<0.000000e+00> : vector<16x32xf32>
    %17 = tpu.matmul %15, %16, %cst_14 {dimension_numbers = #tpu.dot_dimension_numbers<[1], [0], [0], [1], [0, 0, 1, 1], [], []>} : vector<16x64xf32>, vector<64x32xf32>, vector<16x32xf32> -> vector<16x32xf32>
    %c0_15 = arith.constant 0 : index
    %c0_16 = arith.constant 0 : index
    %18 = vector.load %arg7[%c0_15, %c0_16] : memref<1x32xf32, #tpu.memory_space<vmem>>, vector<1x32xf32>
    %19 = vector.broadcast %18 : vector<1x32xf32> to vector<16x32xf32>
    %20 = arith.addf %17, %19 : vector<16x32xf32>
    %cst_17 = arith.constant 0.000000e+00 : f32
    %21 = vector.broadcast %cst_17 : f32 to vector<16x32xf32>
    %22 = arith.maximumf %20, %21 : vector<16x32xf32>
    %c0_18 = arith.constant 0 : index
    %c0_19 = arith.constant 0 : index
    %23 = vector.load %arg8[%c0_18, %c0_19] : memref<32x16xf32, #tpu.memory_space<vmem>>, vector<32x16xf32>
    %cst_20 = arith.constant dense<0.000000e+00> : vector<16x16xf32>
    %24 = tpu.matmul %22, %23, %cst_20 {dimension_numbers = #tpu.dot_dimension_numbers<[1], [0], [0], [1], [0, 0, 1, 1], [], []>} : vector<16x32xf32>, vector<32x16xf32>, vector<16x16xf32> -> vector<16x16xf32>
    %c0_21 = arith.constant 0 : index
    %c0_22 = arith.constant 0 : index
    %25 = vector.load %arg9[%c0_21, %c0_22] : memref<1x16xf32, #tpu.memory_space<vmem>>, vector<1x16xf32>
    %26 = vector.broadcast %25 : vector<1x16xf32> to vector<16x16xf32>
    %27 = arith.addf %24, %26 : vector<16x16xf32>
    %cst_23 = arith.constant 0.000000e+00 : f32
    %28 = vector.broadcast %cst_23 : f32 to vector<16x16xf32>
    %29 = arith.maximumf %27, %28 : vector<16x16xf32>
    %c0_24 = arith.constant 0 : index
    %c0_25 = arith.constant 0 : index
    %30 = vector.load %arg10[%c0_24, %c0_25] : memref<16x8xf32, #tpu.memory_space<vmem>>, vector<16x8xf32>
    %cst_26 = arith.constant dense<0.000000e+00> : vector<16x8xf32>
    %31 = tpu.matmul %29, %30, %cst_26 {dimension_numbers = #tpu.dot_dimension_numbers<[1], [0], [0], [1], [0, 0, 1, 1], [], []>} : vector<16x16xf32>, vector<16x8xf32>, vector<16x8xf32> -> vector<16x8xf32>
    %c0_27 = arith.constant 0 : index
    %c0_28 = arith.constant 0 : index
    %32 = vector.load %arg11[%c0_27, %c0_28] : memref<1x8xf32, #tpu.memory_space<vmem>>, vector<1x8xf32>
    %33 = vector.broadcast %32 : vector<1x8xf32> to vector<16x8xf32>
    %34 = arith.addf %31, %33 : vector<16x8xf32>
    %c0_29 = arith.constant 0 : index
    %c0_30 = arith.constant 0 : index
    %35 = vector.load %arg12[%c0_29, %c0_30] : memref<16x8xf32, #tpu.memory_space<vmem>>, vector<16x8xf32>
    tpu.vector_store %arg12[%c0_29, %c0_30], %34 {strides = array<i32>} : memref<16x8xf32, #tpu.memory_space<vmem>>, vector<16x8xf32>,
    return
  }
  func.func @transform_0(%arg0: i32) -> (i32, i32) {
    %c0_i32 = arith.constant 0 : i32
    %c0_i32_0 = arith.constant 0 : i32
    return %arg0, %c0_i32 : i32, i32
  }
  func.func @transform_1(%arg0: i32) -> (i32, i32) {
    %c0_i32 = arith.constant 0 : i32
    %c0_i32_0 = arith.constant 0 : i32
    %c0_i32_1 = arith.constant 0 : i32
    return %c0_i32, %c0_i32_0 : i32, i32
  }
  func.func @transform_2(%arg0: i32) -> (i32, i32) {
    %c0_i32 = arith.constant 0 : i32
    %c0_i32_0 = arith.constant 0 : i32
    %c0_i32_1 = arith.constant 0 : i32
    return %c0_i32, %c0_i32_0 : i32, i32
  }
  func.func @transform_3(%arg0: i32) -> (i32, i32) {
    %c0_i32 = arith.constant 0 : i32
    %c0_i32_0 = arith.constant 0 : i32
    %c0_i32_1 = arith.constant 0 : i32
    return %c0_i32, %c0_i32_0 : i32, i32
  }
  func.func @transform_4(%arg0: i32) -> (i32, i32) {
    %c0_i32 = arith.constant 0 : i32
    %c0_i32_0 = arith.constant 0 : i32
    %c0_i32_1 = arith.constant 0 : i32
    return %c0_i32, %c0_i32_0 : i32, i32
  }
  func.func @transform_5(%arg0: i32) -> (i32, i32) {
    %c0_i32 = arith.constant 0 : i32
    %c0_i32_0 = arith.constant 0 : i32
    %c0_i32_1 = arith.constant 0 : i32
    return %c0_i32, %c0_i32_0 : i32, i32
  }
  func.func @transform_6(%arg0: i32) -> (i32, i32) {
    %c0_i32 = arith.constant 0 : i32
    %c0_i32_0 = arith.constant 0 : i32
    %c0_i32_1 = arith.constant 0 : i32
    return %c0_i32, %c0_i32_0 : i32, i32
  }
  func.func @transform_7(%arg0: i32) -> (i32, i32) {
    %c0_i32 = arith.constant 0 : i32
    %c0_i32_0 = arith.constant 0 : i32
    %c0_i32_1 = arith.constant 0 : i32
    return %c0_i32, %c0_i32_0 : i32, i32
  }
  func.func @transform_8(%arg0: i32) -> (i32, i32) {
    %c0_i32 = arith.constant 0 : i32
    %c0_i32_0 = arith.constant 0 : i32
    %c0_i32_1 = arith.constant 0 : i32
    return %c0_i32, %c0_i32_0 : i32, i32
  }
  func.func @transform_9(%arg0: i32) -> (i32, i32) {
    %c0_i32 = arith.constant 0 : i32
    %c0_i32_0 = arith.constant 0 : i32
    %c0_i32_1 = arith.constant 0 : i32
    return %c0_i32, %c0_i32_0 : i32, i32
  }
  func.func @transform_10(%arg0: i32) -> (i32, i32) {
    %c0_i32 = arith.constant 0 : i32
    %c0_i32_0 = arith.constant 0 : i32
    %c0_i32_1 = arith.constant 0 : i32
    return %c0_i32, %c0_i32_0 : i32, i32
  }
  func.func @transform_11(%arg0: i32) -> (i32, i32) {
    %c0_i32 = arith.constant 0 : i32
    %c0_i32_0 = arith.constant 0 : i32
    return %arg0, %c0_i32 : i32, i32
  }
}

</mosaic_0001>

<llo_original>
// kernel: tpu_custom_call.1
$region0: #{tpu_custom_call.1}
  #allocation0 [shape = 'u32[]', space=smem, size = 0x4, offset = 0x4, fixed_abs, tag = 'smem constant byte address 0x4 - core index']
  #allocation1 [shape = 'u32[72,128]{1,0:T(1,128)}', space=vmem, size = 0x9000, scoped, tag = 'internal scratch']
  %s0 = inlined_call_operand.vmem [shape: f32[8,256], index: 0, kind: input, shape index: {}]
  %s1 = inlined_call_operand.vmem [shape: bf16[256,128], index: 1, kind: input, shape index: {}]
  %s2 = inlined_call_operand.vmem [shape: f32[1,128], index: 2, kind: input, shape index: {}]
  %s3 = inlined_call_operand.vmem [shape: f32[128,64], index: 3, kind: input, shape index: {}]
  %s4 = inlined_call_operand.vmem [shape: f32[1,64], index: 4, kind: input, shape index: {}]
  %s5 = inlined_call_operand.vmem [shape: f32[64,32], index: 5, kind: input, shape index: {}]
  %s6 = inlined_call_operand.vmem [shape: f32[1,32], index: 6, kind: input, shape index: {}]
  %s7 = inlined_call_operand.vmem [shape: f32[32,16], index: 7, kind: input, shape index: {}]
  %s8 = inlined_call_operand.vmem [shape: f32[1,16], index: 8, kind: input, shape index: {}]
  %s9 = inlined_call_operand.vmem [shape: f32[16,8], index: 9, kind: input, shape index: {}]
  %s10 = inlined_call_operand.vmem [shape: f32[1,8], index: 10, kind: input, shape index: {}]
  %s11 = inlined_call_operand.hbm [shape: f32[8,8], index: 11, kind: output, shape index: {}]
  %s12 = sld [smem:[#allocation0]]
  $region54: #{tpu_custom_call.1} parent=0
    _
  %s14 = ssub.s32 1, %s12
  %s15 = scalar_select 0, %s14, %s12
  $region1: #{tpu_custom_call.1} parent=0
    #allocation2 [shape = 'u8[8192]{0}', space=vmem, size = 0x2000, scoped, tag = 'output window, operand 0, single buffered']
    #allocation3 [shape = 's32[1]{0}', space=sflag, size = 0x4, scoped, tag = 'scoped memory for tpu_custom_call.1']
    %16 = vsyncpa [#allocation3], 0
    // Predicated region
    $region2: #{tpu_custom_call.1} parent=1 // pred_check
      _
    $region3: #{tpu_custom_call.1} parent=1 // pred_check_branch
      %18 = sbr.rel (0) target = $region5
    $region4: #{tpu_custom_call.1} parent=1 // pred_region
      _
    $region5: #{tpu_custom_call.1} parent=1 // pred_fallthru
      _
    // Predicated region
    $region6: #{tpu_custom_call.1} parent=1 // pred_check
      _
    $region7: #{tpu_custom_call.1} parent=1 // pred_check_branch
      %20 = sbr.rel (0) target = $region9
    $region8: #{tpu_custom_call.1} parent=1 // pred_region
      _
    $region9: #{tpu_custom_call.1} parent=1 // pred_fallthru
      _
    // Predicated region
    $region10: #{tpu_custom_call.1} parent=1 // pred_check
      _
    $region11: #{tpu_custom_call.1} parent=1 // pred_check_branch
      %22 = sbr.rel (0) target = $region13
    $region12: #{tpu_custom_call.1} parent=1 // pred_region
      _
    $region13: #{tpu_custom_call.1} parent=1 // pred_fallthru
      _
    // Predicated region
    $region14: #{tpu_custom_call.1} parent=1 // pred_check
      _
    $region15: #{tpu_custom_call.1} parent=1 // pred_check_branch
      %24 = sbr.rel (0) target = $region17
    $region16: #{tpu_custom_call.1} parent=1 // pred_region
      _
    $region17: #{tpu_custom_call.1} parent=1 // pred_fallthru
      _
    // Predicated region
    $region18: #{tpu_custom_call.1} parent=1 // pred_check
      _
    $region19: #{tpu_custom_call.1} parent=1 // pred_check_branch
      %26 = sbr.rel (0) target = $region21
    $region20: #{tpu_custom_call.1} parent=1 // pred_region
      _
    $region21: #{tpu_custom_call.1} parent=1 // pred_fallthru
      _
    // Predicated region
    $region22: #{tpu_custom_call.1} parent=1 // pred_check
      _
    $region23: #{tpu_custom_call.1} parent=1 // pred_check_branch
      %28 = sbr.rel (0) target = $region25
    $region24: #{tpu_custom_call.1} parent=1 // pred_region
      _
    $region25: #{tpu_custom_call.1} parent=1 // pred_fallthru
      _
    // Predicated region
    $region26: #{tpu_custom_call.1} parent=1 // pred_check
      _
    $region27: #{tpu_custom_call.1} parent=1 // pred_check_branch
      %30 = sbr.rel (0) target = $region29
    $region28: #{tpu_custom_call.1} parent=1 // pred_region
      _
    $region29: #{tpu_custom_call.1} parent=1 // pred_fallthru
      _
    // Predicated region
    $region30: #{tpu_custom_call.1} parent=1 // pred_check
      _
    $region31: #{tpu_custom_call.1} parent=1 // pred_check_branch
      %32 = sbr.rel (0) target = $region33
    $region32: #{tpu_custom_call.1} parent=1 // pred_region
      _
    $region33: #{tpu_custom_call.1} parent=1 // pred_fallthru
      _
    // Predicated region
    $region34: #{tpu_custom_call.1} parent=1 // pred_check
      _
    $region35: #{tpu_custom_call.1} parent=1 // pred_check_branch
      %34 = sbr.rel (0) target = $region37
    $region36: #{tpu_custom_call.1} parent=1 // pred_region
      _
    $region37: #{tpu_custom_call.1} parent=1 // pred_fallthru
      _
    // Predicated region
    $region38: #{tpu_custom_call.1} parent=1 // pred_check
      _
    $region39: #{tpu_custom_call.1} parent=1 // pred_check_branch
      %36 = sbr.rel (0) target = $region41
    $region40: #{tpu_custom_call.1} parent=1 // pred_region
      _
    $region41: #{tpu_custom_call.1} parent=1 // pred_fallthru
      _
    // Predicated region
    $region42: #{tpu_custom_call.1} parent=1 // pred_check
      _
    $region43: #{tpu_custom_call.1} parent=1 // pred_check_branch
      %38 = sbr.rel (0) target = $region45
    $region44: #{tpu_custom_call.1} parent=1 // pred_region
      _
    $region45: #{tpu_custom_call.1} parent=1 // pred_fallthru
      _
    %v39 = vld [vmem:[%s0] sm:$0xff]
    %v40 = vld [vmem:[%s0 + $0x8] sm:$0xff]
    %v41 = vld [vmem:[%s0 + $0x10] sm:$0xff]
    %v42 = vld [vmem:[%s0 + $0x18] sm:$0xff]
    %v43 = vpack.c.bf16 %v41, %v39
    %v44 = vpack.c.bf16 %v42, %v40
    %v45 = vld [vmem:[%s1] sm:$0xf]
    %v46 = vld [vmem:[%s1 + $0x4] sm:$0xf]
    %v47 = vld [vmem:[%s1 + $0x8] sm:$0xf]
    %v48 = vld [vmem:[%s1 + $0xc] sm:$0xf]
    %v49 = vld [vmem:[%s1 + $0x10] sm:$0xf]
    %v50 = vld [vmem:[%s1 + $0x14] sm:$0xf]
    %v51 = vld [vmem:[%s1 + $0x18] sm:$0xf]
    %v52 = vld [vmem:[%s1 + $0x1c] sm:$0xf]
    %v53 = vld [vmem:[%s1 + $0x20] sm:$0xf]
    %v54 = vld [vmem:[%s1 + $0x24] sm:$0xf]
    %v55 = vld [vmem:[%s1 + $0x28] sm:$0xf]
    %v56 = vld [vmem:[%s1 + $0x2c] sm:$0xf]
    %v57 = vld [vmem:[%s1 + $0x30] sm:$0xf]
    %v58 = vld [vmem:[%s1 + $0x34] sm:$0xf]
    %v59 = vld [vmem:[%s1 + $0x38] sm:$0xf]
    %v60 = vld [vmem:[%s1 + $0x3c] sm:$0xf]
    %v61 = vld [vmem:[%s1 + $0x40] sm:$0xf]
    %v62 = vld [vmem:[%s1 + $0x44] sm:$0xf]
    %v63 = vld [vmem:[%s1 + $0x48] sm:$0xf]
    %v64 = vld [vmem:[%s1 + $0x4c] sm:$0xf]
    %v65 = vld [vmem:[%s1 + $0x50] sm:$0xf]
    %v66 = vld [vmem:[%s1 + $0x54] sm:$0xf]
    %v67 = vld [vmem:[%s1 + $0x58] sm:$0xf]
    %v68 = vld [vmem:[%s1 + $0x5c] sm:$0xf]
    %v69 = vld [vmem:[%s1 + $0x60] sm:$0xf]
    %v70 = vld [vmem:[%s1 + $0x64] sm:$0xf]
    %v71 = vld [vmem:[%s1 + $0x68] sm:$0xf]
    %v72 = vld [vmem:[%s1 + $0x6c] sm:$0xf]
    %v73 = vld [vmem:[%s1 + $0x70] sm:$0xf]
    %v74 = vld [vmem:[%s1 + $0x74] sm:$0xf]
    %v75 = vld [vmem:[%s1 + $0x78] sm:$0xf]
    %v76 = vld [vmem:[%s1 + $0x7c] sm:$0xf]
    %v77 = vld [vmem:[%s2] sm:$0x1]
    %v79 = vperm.slane %v77, 0
    %v113 = vunpack.c.l.b16 %v45
    %v114 = vunpack.c.l.b16 %v46
    %v115 = vunpack.c.l.b16 %v47
    %v116 = vunpack.c.l.b16 %v48
    %v117 = vunpack.c.l.b16 %v49
    %v118 = vunpack.c.l.b16 %v50
    %v119 = vunpack.c.l.b16 %v51
    %v120 = vunpack.c.l.b16 %v52
    %v121 = vunpack.c.l.b16 %v53
    %v122 = vunpack.c.l.b16 %v54
    %v123 = vunpack.c.l.b16 %v55
    %v124 = vunpack.c.l.b16 %v56
    %v125 = vunpack.c.l.b16 %v57
    %v126 = vunpack.c.l.b16 %v58
    %v127 = vunpack.c.l.b16 %v59
    %v128 = vunpack.c.l.b16 %v60
    %v129 = vunpack.c.l.b16 %v61
    %v130 = vunpack.c.l.b16 %v62
    %v131 = vunpack.c.l.b16 %v63
    %v132 = vunpack.c.l.b16 %v64
    %v133 = vunpack.c.l.b16 %v65
    %v134 = vunpack.c.l.b16 %v66
    %v135 = vunpack.c.l.b16 %v67
    %v136 = vunpack.c.l.b16 %v68
    %v137 = vunpack.c.l.b16 %v69
    %v138 = vunpack.c.l.b16 %v70
    %v139 = vunpack.c.l.b16 %v71
    %v140 = vunpack.c.l.b16 %v72
    %v141 = vunpack.c.l.b16 %v73
    %v142 = vunpack.c.l.b16 %v74
    %v143 = vunpack.c.l.b16 %v75
    %v144 = vunpack.c.l.b16 %v76
    %v145 = vpack.c.b16 %v114, %v113
    %v146 = vpack.c.b16 %v116, %v115
    %v147 = vpack.c.b16 %v118, %v117
    %v148 = vpack.c.b16 %v120, %v119
    %v149 = vpack.c.b16 %v122, %v121
    %v150 = vpack.c.b16 %v124, %v123
    %v151 = vpack.c.b16 %v126, %v125
    %v152 = vpack.c.b16 %v128, %v127
    %v153 = vpack.c.b16 %v130, %v129
    %v154 = vpack.c.b16 %v132, %v131
    %v155 = vpack.c.b16 %v134, %v133
    %v156 = vpack.c.b16 %v136, %v135
    %v157 = vpack.c.b16 %v138, %v137
    %v158 = vpack.c.b16 %v140, %v139
    %v159 = vpack.c.b16 %v142, %v141
    %v160 = vpack.c.b16 %v144, %v143
    %177 = vmatpush.bf16.msra.mxu0 %v152
    %178 = vmatpush.bf16.msra.mxu0 %v151
    %179 = vmatpush.bf16.msra.mxu0 %v150
    %180 = vmatpush.bf16.msra.mxu0 %v149
    %181 = vmatpush.bf16.msra.mxu0 %v148
    %182 = vmatpush.bf16.msra.mxu0 %v147
    %183 = vmatpush.bf16.msra.mxu0 %v146
    %184 = vmatpush.bf16.msra.mxu0 %v145
    %185 = vmatmul.bf16.gmra.mxu0 %v43
    %v186 = vpop.f32.mrf.mxu0
    %v187 = vadd.f32 %v79, %v186
    %v188 = vpop.f32.mrf.mxu0
    %v189 = vadd.f32 %v79, %v188
    %190 = vdwg.mxu0
    %191 = vmatpush.bf16.msra.mxu0 %v160
    %192 = vmatpush.bf16.msra.mxu0 %v159
    %193 = vmatpush.bf16.msra.mxu0 %v158
    %194 = vmatpush.bf16.msra.mxu0 %v157
    %195 = vmatpush.bf16.msra.mxu0 %v156
    %196 = vmatpush.bf16.msra.mxu0 %v155
    %197 = vmatpush.bf16.msra.mxu0 %v154
    %198 = vmatpush.bf16.msra.mxu0 %v153
    %199 = vmatmul.bf16.gmra.mxu0 %v44
    %v200 = vpop.f32.mrf.mxu0
    %v201 = vadd.f32 %v187, %v200
    %v202 = vpop.f32.mrf.mxu0
    %v203 = vadd.f32 %v189, %v202
    %204 = vdwg.mxu0
    %v205 = vmax.f32 %v201, 0.0
    %v206 = vmax.f32 %v203, 0.0
    %v207 = vld [vmem:[%s3] sm:$0xff]
    %v208 = vld [vmem:[%s3 + $0x8] sm:$0xff]
    %v209 = vld [vmem:[%s3 + $0x10] sm:$0xff]
    %v210 = vld [vmem:[%s3 + $0x18] sm:$0xff]
    %v211 = vld [vmem:[%s3 + $0x20] sm:$0xff]
    %v212 = vld [vmem:[%s3 + $0x28] sm:$0xff]
    %v213 = vld [vmem:[%s3 + $0x30] sm:$0xff]
    %v214 = vld [vmem:[%s3 + $0x38] sm:$0xff]
    %v215 = vld [vmem:[%s3 + $0x40] sm:$0xff]
    %v216 = vld [vmem:[%s3 + $0x48] sm:$0xff]
    %v217 = vld [vmem:[%s3 + $0x50] sm:$0xff]
    %v218 = vld [vmem:[%s3 + $0x58] sm:$0xff]
    %v219 = vld [vmem:[%s3 + $0x60] sm:$0xff]
    %v220 = vld [vmem:[%s3 + $0x68] sm:$0xff]
    %v221 = vld [vmem:[%s3 + $0x70] sm:$0xff]
    %v222 = vld [vmem:[%s3 + $0x78] sm:$0xff]
    %v223 = vld [vmem:[%s4] sm:$0x1]
    %v225 = vperm.slane %v223, 0
    %227 = vmatpush.msra.mxu0 %v222
    %228 = vmatpush.msra.mxu0 %v221
    %229 = vmatpush.msra.mxu0 %v220
    %230 = vmatpush.msra.mxu0 %v219
    %231 = vmatpush.msra.mxu0 %v218
    %232 = vmatpush.msra.mxu0 %v217
    %233 = vmatpush.msra.mxu0 %v216
    %234 = vmatpush.msra.mxu0 %v215
    %235 = vmatpush.msra.mxu0 %v214
    %236 = vmatpush.msra.mxu0 %v213
    %237 = vmatpush.msra.mxu0 %v212
    %238 = vmatpush.msra.mxu0 %v211
    %239 = vmatpush.msra.mxu0 %v210
    %240 = vmatpush.msra.mxu0 %v209
    %241 = vmatpush.msra.mxu0 %v208
    %242 = vmatpush.msra.mxu0 %v207
    %243 = vmatmul.f32.gmra.mxu0 %v205
    %v244 = vpop.f32.mrf.mxu0
    %v245 = vadd.f32 %v225, %v244
    %246 = vmatmul.f32.gmra.mxu0 %v206
    %v247 = vpop.f32.mrf.mxu0
    %v248 = vadd.f32 %v225, %v247
    %249 = vdwg.mxu0
    %v250 = vmax.f32 %v245, 0.0
    %v251 = vmax.f32 %v248, 0.0
    %v252 = vld [vmem:[%s5] sm:$0xff]
    %v253 = vld [vmem:[%s5 + $0x8] sm:$0xff]
    %v254 = vld [vmem:[%s5 + $0x10] sm:$0xff]
    %v255 = vld [vmem:[%s5 + $0x18] sm:$0xff]
    %v256 = vld [vmem:[%s5 + $0x20] sm:$0xff]
    %v257 = vld [vmem:[%s5 + $0x28] sm:$0xff]
    %v258 = vld [vmem:[%s5 + $0x30] sm:$0xff]
    %v259 = vld [vmem:[%s5 + $0x38] sm:$0xff]
    %v260 = vld [vmem:[%s6] sm:$0x1]
    %v262 = vperm.slane %v260, 0
    %vm264 = vcmask 523264
    %v266 = vsel %vm264, %v250, 0
    %v269 = vsel %vm264, %v251, 0
    %271 = vmatpush.msra.mxu0 0.0
    %272 = vmatpush.msra.mxu0 0.0
    %273 = vmatpush.msra.mxu0 0.0
    %274 = vmatpush.msra.mxu0 0.0
    %275 = vmatpush.msra.mxu0 0.0
    %276 = vmatpush.msra.mxu0 0.0
    %277 = vmatpush.msra.mxu0 0.0
    %278 = vmatpush.msra.mxu0 0.0
    %279 = vmatpush.msra.mxu0 %v259
    %280 = vmatpush.msra.mxu0 %v258
    %281 = vmatpush.msra.mxu0 %v257
    %282 = vmatpush.msra.mxu0 %v256
    %283 = vmatpush.msra.mxu0 %v255
    %284 = vmatpush.msra.mxu0 %v254
    %285 = vmatpush.msra.mxu0 %v253
    %286 = vmatpush.msra.mxu0 %v252
    %287 = vmatmul.f32.gmra.mxu0 %v266
    %v288 = vpop.f32.mrf.mxu0
    %v289 = vadd.f32 %v262, %v288
    %290 = vmatmul.f32.gmra.mxu0 %v269
    %v291 = vpop.f32.mrf.mxu0
    %v292 = vadd.f32 %v262, %v291
    %293 = vdwg.mxu0
    %v294 = vmax.f32 %v289, 0.0
    %v295 = vmax.f32 %v292, 0.0
    %v296 = vld [vmem:[%s7] sm:$0xff]
    %v297 = vld [vmem:[%s7 + $0x8] sm:$0xff]
    %v298 = vld [vmem:[%s7 + $0x10] sm:$0xff]
    %v299 = vld [vmem:[%s7 + $0x18] sm:$0xff]
    %v300 = vld [vmem:[%s8] sm:$0x1]
    %v302 = vperm.slane %v300, 0
    %vm304 = vcmask 261120
    %v306 = vsel %vm304, %v294, 0
    %v309 = vsel %vm304, %v295, 0
    %311 = vmatpush.msra.mxu0 0.0
    %312 = vmatpush.msra.mxu0 0.0
    %313 = vmatpush.msra.mxu0 0.0
    %314 = vmatpush.msra.mxu0 0.0
    %315 = vmatpush.msra.mxu0 0.0
    %316 = vmatpush.msra.mxu0 0.0
    %317 = vmatpush.msra.mxu0 0.0
    %318 = vmatpush.msra.mxu0 0.0
    %319 = vmatpush.msra.mxu0 0.0
    %320 = vmatpush.msra.mxu0 0.0
    %321 = vmatpush.msra.mxu0 0.0
    %322 = vmatpush.msra.mxu0 0.0
    %323 = vmatpush.msra.mxu0 %v299
    %324 = vmatpush.msra.mxu0 %v298
    %325 = vmatpush.msra.mxu0 %v297
    %326 = vmatpush.msra.mxu0 %v296
    %327 = vmatmul.f32.gmra.mxu0 %v306
    %v328 = vpop.f32.mrf.mxu0
    %v329 = vadd.f32 %v302, %v328
    %330 = vmatmul.f32.gmra.mxu0 %v309
    %v331 = vpop.f32.mrf.mxu0
    %v332 = vadd.f32 %v302, %v331
    %333 = vdwg.mxu0
    %v334 = vmax.f32 %v329, 0.0
    %v335 = vmax.f32 %v332, 0.0
    %v336 = vld [vmem:[%s9] sm:$0xff]
    %v337 = vld [vmem:[%s9 + $0x8] sm:$0xff]
    %v338 = vld [vmem:[%s10] sm:$0x1]
    %v340 = vperm.slane %v338, 0
    %vm342 = vcmask 130048
    %v344 = vsel %vm342, %v334, 0
    %v347 = vsel %vm342, %v335, 0
    %349 = vmatpush.msra.mxu0 0.0
    %350 = vmatpush.msra.mxu0 0.0
    %351 = vmatpush.msra.mxu0 0.0
    %352 = vmatpush.msra.mxu0 0.0
    %353 = vmatpush.msra.mxu0 0.0
    %354 = vmatpush.msra.mxu0 0.0
    %355 = vmatpush.msra.mxu0 0.0
    %356 = vmatpush.msra.mxu0 0.0
    %357 = vmatpush.msra.mxu0 0.0
    %358 = vmatpush.msra.mxu0 0.0
    %359 = vmatpush.msra.mxu0 0.0
    %360 = vmatpush.msra.mxu0 0.0
    %361 = vmatpush.msra.mxu0 0.0
    %362 = vmatpush.msra.mxu0 0.0
    %363 = vmatpush.msra.mxu0 %v337
    %364 = vmatpush.msra.mxu0 %v336
    %365 = vmatmul.f32.gmra.mxu0 %v344
    %v366 = vpop.f32.mrf.mxu0
    %v367 = vadd.f32 %v340, %v366
    %368 = vmatmul.f32.gmra.mxu0 %v347
    %v369 = vpop.f32.mrf.mxu0
    %v370 = vadd.f32 %v340, %v369
    %371 = vdwg.mxu0
    %vm372 = vcmask 64512
    %373 = vst.msk [vmem:[#allocation2] sm:$0xff] %vm372, %v367
    %374 = vst.msk [vmem:[#allocation2 + $0x8] sm:$0xff] %vm372, %v370
    // Predicated region
    $region46: #{tpu_custom_call.1} parent=1 // pred_check
      _
    $region47: #{tpu_custom_call.1} parent=1 // pred_check_branch
      %376 = sbr.rel (0) target = $region49
    $region48: #{tpu_custom_call.1} parent=1 // pred_region
      %378 = vsyncadd [#allocation3], 128
      %s379 = sshll.u32 [#allocation2], 4
      %s380 = int_to_ptr.vmem [resolvable:$true] %s379
      %s381 = sshll.u32 %s11, 4
      %s382 = int_to_ptr.hbm [resolvable:$true] %s381
      %387 = dma.vmem_to_hbm [thread:$0]  %s380, 128, %s382, [#allocation3], 128, 128, 8
    $region49: #{tpu_custom_call.1} parent=1 // pred_fallthru
      _
    // Predicated region
    $region50: #{tpu_custom_call.1} parent=1 // pred_check
      _
    $region51: #{tpu_custom_call.1} parent=1 // pred_check_branch
      %389 = sbr.rel (0) target = $region53
    $region52: #{tpu_custom_call.1} parent=1 // pred_region
      %391 = dma.done [#allocation3], 256
    $region53: #{tpu_custom_call.1} parent=1 // pred_fallthru
      _
    %392 = vsyncpa [#allocation3], 1

</llo_original>
